<compile_context>
chip_gen: v5e
topology: v5e:2x2
jax: 0.10.0
libtpu: 0.0.40
codegen_flags: <defaults>
</compile_context>

<pallas_src>
import functools
import math

import jax
import jax.numpy as jnp
import numpy as np
from jax.experimental import pallas as pl
from jax.experimental.pallas import tpu as pltpu


def _lqmha_kernel(q_ref, v_ref, vbd_ref, bias_ref, wq_ref, wk_ref, out_ref,
                  *, n_head: int, d_k: int, scale: float):
    """One grid step == one batch element.

    q_ref:    (1, n_q, d_q_in)          bf16   learned queries for this batch element
    v_ref:    (1, t, d_in)              bf16   values (key-projection input)
    vbd_ref:  (1, n_head*t, d_in)       bf16   block-diagonal V (head h in rows h*t:(h+1)*t,
                                               cols h*d_v:(h+1)*d_v)
    bias_ref: (1, 1, t)                 f32    additive key bias: 0 = attend, -1e30 = padded
    wq_ref:   (d_q_in, n_head*d_k)      bf16   merged query projection weights
    wk_ref:   (d_in,   n_head*d_k)      bf16   merged key projection weights
    out_ref:  (1, n_q, d_in)            f32
    """
    q2 = q_ref[0]                              # (n_q, d_q_in)  bf16
    v2 = v_ref[0]                              # (t,   d_in)    bf16

    n_q = q2.shape[0]
    t = v2.shape[0]

    # Two full-width projections on the MXU (bf16 in, f32 accumulate).
    # Scale is folded into the small projected-Q tensor, not the score matrices.
    qp = (jnp.dot(q2, wq_ref[...], preferred_element_type=jnp.float32)
          * scale).astype(jnp.bfloat16)        # (n_q, n_head*d_k)
    kp = jnp.dot(v2, wk_ref[...],
                 preferred_element_type=jnp.float32).astype(jnp.bfloat16)   # (t, n_head*d_k)

    # Hoist the bias broadcast out of the (unrolled) head loop.
    bias = jnp.broadcast_to(bias_ref[0], (n_q, t))     # (n_q, t) f32

    attn_heads = []
    for h in range(n_head):                    # static, fully unrolled (n_head is small)
        qh = qp[:, h * d_k:(h + 1) * d_k]      # static lane slices of the merged projections
        kh = kp[:, h * d_k:(h + 1) * d_k]

        # Scores: contract last dims directly (no materialized transpose).
        s = jax.lax.dot_general(
            qh, kh, (((1,), (1,)), ((), ())),
            preferred_element_type=jnp.float32) + bias                     # (n_q, t)

        # Softmax over keys (f32 on the VPU; reciprocal on the EUP slot).
        m = jnp.max(s, axis=-1, keepdims=True)
        p = jnp.exp(s - m)
        denom = jnp.sum(p, axis=-1, keepdims=True)
        attn_heads.append((p * pl.reciprocal(denom, approx=True)).astype(jnp.bfloat16))

    # Single bf16 AV matmul against the block-diagonal V: the result is already laid out as
    # 'b nq (h c)', so the one output store is lane-dense (no concat epilogue).
    attn_cat = jnp.concatenate(attn_heads, axis=-1)                        # (n_q, n_head*t)
    out = jnp.dot(attn_cat, vbd_ref[0], preferred_element_type=jnp.float32)  # (n_q, d_in)
    out_ref[0] = out.astype(out_ref.dtype)


def learned_q_mha(q, v, w_q, w_k, n_head: int, d_k: int, pad_mask=None, *, neg_inf=-1e30):
    """Pallas implementation of LearnedQMultiHeadAttention.forward.

    q:        (n_head, b, n_q, d_q_in // n_head)   ('nh b t c' in the PyTorch code)
    v:        (b, t, d_in)
    w_q:      (d_q_in, n_head*d_k)   == fc1_q.weight.T
    w_k:      (d_in,   n_head*d_k)   == fc1_k.weight.T
    pad_mask: (b, t) bool, True = position participates in attention
    returns:  (b, n_q, d_in)
    """
    nh, b, n_q, c_q = q.shape
    assert nh == n_head
    _, t, d_in = v.shape
    d_q_in = nh * c_q
    assert d_in % n_head == 0
    d_v = d_in // n_head
    assert w_q.shape == (d_q_in, n_head * d_k)
    assert w_k.shape == (d_in, n_head * d_k)

    # 'nh b t c -> b t (nh c)'.  bf16 operands for the MXU.
    q3 = jnp.transpose(q, (1, 2, 0, 3)).reshape(b, n_q, d_q_in).astype(jnp.bfloat16)
    v_bf = v.astype(jnp.bfloat16)

    # Block-diagonal V per batch element (head h occupies rows h*t:(h+1)*t and
    # cols h*d_v:(h+1)*d_v).  One matmul with it == per-head AV already concatenated
    # in the output channel order produced by torch.split + 'b h nq c -> b nq (h c)'.
    vperm = v.reshape(b, t, n_head, d_v).transpose(0, 2, 1, 3)            # (b, nh, t, d_v)
    eye = jnp.eye(n_head, dtype=v.dtype)
    vbd = jnp.einsum("bhtd,hg->bhtgd", vperm, eye).reshape(
        b, n_head * t, d_in).astype(jnp.bfloat16)

    # Tiny per-key additive bias row (replaces the old materialized (b*n_q, b*t) f32 mask).
    if pad_mask is None:
        bias_row = jnp.zeros((b, 1, t), jnp.float32)
    else:
        bias_row = jnp.where(pad_mask, 0.0, neg_inf).astype(jnp.float32).reshape(b, 1, t)

    wq_bf = w_q.astype(jnp.bfloat16)
    wk_bf = w_k.astype(jnp.bfloat16)

    kernel = functools.partial(_lqmha_kernel, n_head=n_head, d_k=d_k,
                               scale=1.0 / math.sqrt(d_k))

    out = pl.pallas_call(
        kernel,
        out_shape=jax.ShapeDtypeStruct((b, n_q, d_in), jnp.float32),
        grid_spec=pltpu.PrefetchScalarGridSpec(
            num_scalar_prefetch=0,
            grid=(b,),   # batch as a parallel grid axis (v7x: 2 TensorCores split it)
            in_specs=[
                pl.BlockSpec((1, n_q, d_q_in), lambda i: (i, 0, 0)),
                pl.BlockSpec((1, t, d_in), lambda i: (i, 0, 0)),
                pl.BlockSpec((1, n_head * t, d_in), lambda i: (i, 0, 0)),
                pl.BlockSpec((1, 1, t), lambda i: (i, 0, 0)),
                # Constant-index weight blocks (DMA'd once; single-buffering them via
                # pipeline_mode=pl.Buffered(1) is the follow-up VMEM save at scale).
                pl.BlockSpec((d_q_in, n_head * d_k), lambda i: (0, 0)),
                pl.BlockSpec((d_in, n_head * d_k), lambda i: (0, 0)),
            ],
            out_specs=pl.BlockSpec((1, n_q, d_in), lambda i: (i, 0, 0)),
        ),
        compiler_params=pltpu.CompilerParams(
            dimension_semantics=("parallel",)),
    )(q3, v_bf, vbd, bias_row, wq_bf, wk_bf)

    return out


def reference(q, v, w_q, w_k, n_head, d_k, pad_mask=None, neg_inf=-1e30):
    """Plain-JAX replica of the PyTorch forward, mirroring the kernel's numeric path
    (bf16 MXU operands, f32 accumulation, f32 softmax)."""
    nh, b, n_q, c_q = q.shape
    _, t, d_in = v.shape
    d_v = d_in // n_head
    q_flat = jnp.transpose(q, (1, 2, 0, 3)).reshape(b, n_q, nh * c_q)
    qp = jnp.dot(q_flat.astype(jnp.bfloat16), w_q.astype(jnp.bfloat16),
                 preferred_element_type=jnp.float32) / math.sqrt(d_k)
    kp = jnp.dot(v.astype(jnp.bfloat16), w_k.astype(jnp.bfloat16),
                 preferred_element_type=jnp.float32)
    qp = qp.reshape(b, n_q, n_head, d_k).transpose(0, 2, 1, 3).astype(jnp.bfloat16)   # b h nq dk
    kp = kp.reshape(b, t, n_head, d_k).transpose(0, 2, 1, 3).astype(jnp.bfloat16)     # b h t  dk
    vp = v.reshape(b, t, n_head, d_v).transpose(0, 2, 1, 3).astype(jnp.bfloat16)      # b h t  dv
    s = jnp.einsum("bhqd,bhkd->bhqk", qp, kp, preferred_element_type=jnp.float32)
    if pad_mask is not None:
        s = s + jnp.where(pad_mask, 0.0, neg_inf)[:, None, None, :]
    attn = jax.nn.softmax(s, axis=-1).astype(jnp.bfloat16)
    o = jnp.einsum("bhqk,bhkd->bhqd", attn, vp, preferred_element_type=jnp.float32)   # b h nq dv
    return o.transpose(0, 2, 1, 3).reshape(b, n_q, n_head * d_v)                      # b nq (h dv)


if __name__ == "__main__":
    # Module hyperparameters (small, consistent with the nn.Module __init__).
    n_head, d_k = 4, 8
    d_in = 32            # must be divisible by n_head (torch.split of v)
    d_q_in = 16          # learned-query channel dim; q arrives split across heads
    b, t, n_q = 2, 8, 4

    key = jax.random.PRNGKey(0)
    k1, k2, k3, k4 = jax.random.split(key, 4)

    # Inputs.
    v = jax.random.normal(k1, (b, t, d_in), dtype=jnp.float32)
    q = jax.random.normal(k2, (n_head, b, n_q, d_q_in // n_head), dtype=jnp.float32)
    pad_mask = jnp.ones((b, t), dtype=bool).at[1, t - 2:].set(False)  # padding in batch 1

    # Parameters (deterministic synthetic init; stored as (in, out) = weight.T).
    # fc1_k: nn.init.normal_(std=sqrt(2/d_k)); fc1_q: default Linear init (approximated).
    w_k = jax.random.normal(k3, (d_in, n_head * d_k), dtype=jnp.float32) * np.sqrt(2.0 / d_k)
    w_q = jax.random.normal(k4, (d_q_in, n_head * d_k), dtype=jnp.float32) * np.sqrt(1.0 / d_q_in)
    # TODO(synk): exact PyTorch kaiming-uniform init for fc1_q not reproduced bit-for-bit.

    out = learned_q_mha(q, v, w_q, w_k, n_head, d_k, pad_mask=pad_mask)
    out = jax.block_until_ready(out)
    assert out.shape == (b, n_q, d_in), out.shape

    ref = reference(q, v, w_q, w_k, n_head, d_k, pad_mask=pad_mask)
    # Tolerance accounts for the approx (EUP) reciprocal in the kernel softmax.
    np.testing.assert_allclose(np.asarray(out), np.asarray(ref), rtol=1e-2, atol=1e-2)

    print("KERNEL_OK")
</pallas_src>

<mosaic_0001>
module attributes {stable_mosaic.version = 11 : i64} {
  func.func @_lqmha_kernel(%arg0: i32, %arg1: memref<1x4x16xbf16, #tpu.memory_space<vmem>>, %arg2: memref<1x8x32xbf16, #tpu.memory_space<vmem>>, %arg3: memref<1x32x32xbf16, #tpu.memory_space<vmem>>, %arg4: memref<1x1x8xf32, #tpu.memory_space<vmem>>, %arg5: memref<16x32xbf16, #tpu.memory_space<vmem>>, %arg6: memref<32x32xbf16, #tpu.memory_space<vmem>>, %arg7: memref<1x4x32xf32, #tpu.memory_space<vmem>>) attributes {dimension_semantics = [#tpu.dimension_semantics<parallel>], iteration_bounds = array<i64: 2>, scalar_prefetch = 0 : i64, scratch_operands = 0 : i64, tpu.core_type = #tpu.core_type<tc>, window_params = [{transform_indices = @transform_0, window_bounds = array<i64: 1, 4, 16>}, {transform_indices = @transform_1, window_bounds = array<i64: 1, 8, 32>}, {transform_indices = @transform_2, window_bounds = array<i64: 1, 32, 32>}, {transform_indices = @transform_3, window_bounds = array<i64: 1, 1, 8>}, {pipeline_mode = #tpu.pipeline_mode<synchronous>, transform_indices = @transform_4, window_bounds = array<i64: 16, 32>}, {pipeline_mode = #tpu.pipeline_mode<synchronous>, transform_indices = @transform_5, window_bounds = array<i64: 32, 32>}, {transform_indices = @transform_6, window_bounds = array<i64: 1, 4, 32>}]} {
    %c0 = arith.constant 0 : index
    %c0_0 = arith.constant 0 : index
    %c0_1 = arith.constant 0 : index
    %0 = vector.load %arg1[%c0, %c0_0, %c0_1] : memref<1x4x16xbf16, #tpu.memory_space<vmem>>, vector<1x4x16xbf16>
    %1 = vector.shape_cast %0 : vector<1x4x16xbf16> to vector<4x16xbf16>
    %c0_2 = arith.constant 0 : index
    %c0_3 = arith.constant 0 : index
    %c0_4 = arith.constant 0 : index
    %2 = vector.load %arg2[%c0_2, %c0_3, %c0_4] : memref<1x8x32xbf16, #tpu.memory_space<vmem>>, vector<1x8x32xbf16>
    %3 = vector.shape_cast %2 : vector<1x8x32xbf16> to vector<8x32xbf16>
    %c0_5 = arith.constant 0 : index
    %c0_6 = arith.constant 0 : index
    %4 = vector.load %arg5[%c0_5, %c0_6] : memref<16x32xbf16, #tpu.memory_space<vmem>>, vector<16x32xbf16>
    %cst = arith.constant dense<0.000000e+00> : vector<4x32xf32>
    %5 = tpu.matmul %1, %4, %cst {dimension_numbers = #tpu.dot_dimension_numbers<[1], [0], [0], [1], [0, 0, 1, 1], [], []>} : vector<4x16xbf16>, vector<16x32xbf16>, vector<4x32xf32> -> vector<4x32xf32>
    %cst_7 = arith.constant 0.353553385 : f32
    %6 = vector.broadcast %cst_7 : f32 to vector<4x32xf32>
    %7 = arith.mulf %5, %6 : vector<4x32xf32>
    %8 = arith.truncf %7 : vector<4x32xf32> to vector<4x32xbf16>
    %c0_8 = arith.constant 0 : index
    %c0_9 = arith.constant 0 : index
    %9 = vector.load %arg6[%c0_8, %c0_9] : memref<32x32xbf16, #tpu.memory_space<vmem>>, vector<32x32xbf16>
    %cst_10 = arith.constant dense<0.000000e+00> : vector<8x32xf32>
    %10 = tpu.matmul %3, %9, %cst_10 {dimension_numbers = #tpu.dot_dimension_numbers<[1], [0], [0], [1], [0, 0, 1, 1], [], []>} : vector<8x32xbf16>, vector<32x32xbf16>, vector<8x32xf32> -> vector<8x32xf32>
    %11 = arith.truncf %10 : vector<8x32xf32> to vector<8x32xbf16>
    %c0_11 = arith.constant 0 : index
    %c0_12 = arith.constant 0 : index
    %c0_13 = arith.constant 0 : index
    %12 = vector.load %arg4[%c0_11, %c0_12, %c0_13] : memref<1x1x8xf32, #tpu.memory_space<vmem>>, vector<1x1x8xf32>
    %13 = vector.shape_cast %12 : vector<1x1x8xf32> to vector<1x8xf32>
    %14 = vector.shape_cast %13 : vector<1x8xf32> to vector<1x8xf32>
    %15 = vector.broadcast %14 : vector<1x8xf32> to vector<4x8xf32>
    %16 = vector.extract_strided_slice %8 {offsets = [0, 0], sizes = [4, 8], strides = [1, 1]} : vector<4x32xbf16> to vector<4x8xbf16>
    %17 = vector.extract_strided_slice %11 {offsets = [0, 0], sizes = [8, 8], strides = [1, 1]} : vector<8x32xbf16> to vector<8x8xbf16>
    %cst_14 = arith.constant dense<0.000000e+00> : vector<4x8xf32>
    %18 = tpu.matmul %16, %17, %cst_14 {dimension_numbers = #tpu.dot_dimension_numbers<[1], [1], [0], [0], [0, 0, 1, 0], [], []>} : vector<4x8xbf16>, vector<8x8xbf16>, vector<4x8xf32> -> vector<4x8xf32>
    %19 = arith.addf %18, %15 : vector<4x8xf32>
    %cst_15 = arith.constant dense<0xFF800000> : vector<4xf32>
    %20 = vector.multi_reduction <maximumf>, %19, %cst_15 [1] : vector<4x8xf32> to vector<4xf32>
    %21 = vector.shape_cast %20 : vector<4xf32> to vector<4x1xf32>
    %22 = vector.broadcast %21 : vector<4x1xf32> to vector<4x8xf32>
    %23 = arith.subf %19, %22 : vector<4x8xf32>
    %24 = math.exp %23 : vector<4x8xf32>
    %cst_16 = arith.constant dense<0.000000e+00> : vector<4xf32>
    %25 = vector.multi_reduction <add>, %24, %cst_16 [1] : vector<4x8xf32> to vector<4xf32>
    %26 = vector.shape_cast %25 : vector<4xf32> to vector<4x1xf32>
    %27 = tpu.reciprocal %26 {approx = true} : vector<4x1xf32> -> vector<4x1xf32>
    %28 = vector.broadcast %27 : vector<4x1xf32> to vector<4x8xf32>
    %29 = arith.mulf %24, %28 : vector<4x8xf32>
    %30 = arith.truncf %29 : vector<4x8xf32> to vector<4x8xbf16>
    %31 = vector.extract_strided_slice %8 {offsets = [0, 8], sizes = [4, 8], strides = [1, 1]} : vector<4x32xbf16> to vector<4x8xbf16>
    %32 = vector.extract_strided_slice %11 {offsets = [0, 8], sizes = [8, 8], strides = [1, 1]} : vector<8x32xbf16> to vector<8x8xbf16>
    %cst_17 = arith.constant dense<0.000000e+00> : vector<4x8xf32>
    %33 = tpu.matmul %31, %32, %cst_17 {dimension_numbers = #tpu.dot_dimension_numbers<[1], [1], [0], [0], [0, 0, 1, 0], [], []>} : vector<4x8xbf16>, vector<8x8xbf16>, vector<4x8xf32> -> vector<4x8xf32>
    %34 = arith.addf %33, %15 : vector<4x8xf32>
    %cst_18 = arith.constant dense<0xFF800000> : vector<4xf32>
    %35 = vector.multi_reduction <maximumf>, %34, %cst_18 [1] : vector<4x8xf32> to vector<4xf32>
    %36 = vector.shape_cast %35 : vector<4xf32> to vector<4x1xf32>
    %37 = vector.broadcast %36 : vector<4x1xf32> to vector<4x8xf32>
    %38 = arith.subf %34, %37 : vector<4x8xf32>
    %39 = math.exp %38 : vector<4x8xf32>
    %cst_19 = arith.constant dense<0.000000e+00> : vector<4xf32>
    %40 = vector.multi_reduction <add>, %39, %cst_19 [1] : vector<4x8xf32> to vector<4xf32>
    %41 = vector.shape_cast %40 : vector<4xf32> to vector<4x1xf32>
    %42 = tpu.reciprocal %41 {approx = true} : vector<4x1xf32> -> vector<4x1xf32>
    %43 = vector.broadcast %42 : vector<4x1xf32> to vector<4x8xf32>
    %44 = arith.mulf %39, %43 : vector<4x8xf32>
    %45 = arith.truncf %44 : vector<4x8xf32> to vector<4x8xbf16>
    %46 = vector.extract_strided_slice %8 {offsets = [0, 16], sizes = [4, 8], strides = [1, 1]} : vector<4x32xbf16> to vector<4x8xbf16>
    %47 = vector.extract_strided_slice %11 {offsets = [0, 16], sizes = [8, 8], strides = [1, 1]} : vector<8x32xbf16> to vector<8x8xbf16>
    %cst_20 = arith.constant dense<0.000000e+00> : vector<4x8xf32>
    %48 = tpu.matmul %46, %47, %cst_20 {dimension_numbers = #tpu.dot_dimension_numbers<[1], [1], [0], [0], [0, 0, 1, 0], [], []>} : vector<4x8xbf16>, vector<8x8xbf16>, vector<4x8xf32> -> vector<4x8xf32>
    %49 = arith.addf %48, %15 : vector<4x8xf32>
    %cst_21 = arith.constant dense<0xFF800000> : vector<4xf32>
    %50 = vector.multi_reduction <maximumf>, %49, %cst_21 [1] : vector<4x8xf32> to vector<4xf32>
    %51 = vector.shape_cast %50 : vector<4xf32> to vector<4x1xf32>
    %52 = vector.broadcast %51 : vector<4x1xf32> to vector<4x8xf32>
    %53 = arith.subf %49, %52 : vector<4x8xf32>
    %54 = math.exp %53 : vector<4x8xf32>
    %cst_22 = arith.constant dense<0.000000e+00> : vector<4xf32>
    %55 = vector.multi_reduction <add>, %54, %cst_22 [1] : vector<4x8xf32> to vector<4xf32>
    %56 = vector.shape_cast %55 : vector<4xf32> to vector<4x1xf32>
    %57 = tpu.reciprocal %56 {approx = true} : vector<4x1xf32> -> vector<4x1xf32>
    %58 = vector.broadcast %57 : vector<4x1xf32> to vector<4x8xf32>
    %59 = arith.mulf %54, %58 : vector<4x8xf32>
    %60 = arith.truncf %59 : vector<4x8xf32> to vector<4x8xbf16>
    %61 = vector.extract_strided_slice %8 {offsets = [0, 24], sizes = [4, 8], strides = [1, 1]} : vector<4x32xbf16> to vector<4x8xbf16>
    %62 = vector.extract_strided_slice %11 {offsets = [0, 24], sizes = [8, 8], strides = [1, 1]} : vector<8x32xbf16> to vector<8x8xbf16>
    %cst_23 = arith.constant dense<0.000000e+00> : vector<4x8xf32>
    %63 = tpu.matmul %61, %62, %cst_23 {dimension_numbers = #tpu.dot_dimension_numbers<[1], [1], [0], [0], [0, 0, 1, 0], [], []>} : vector<4x8xbf16>, vector<8x8xbf16>, vector<4x8xf32> -> vector<4x8xf32>
    %64 = arith.addf %63, %15 : vector<4x8xf32>
    %cst_24 = arith.constant dense<0xFF800000> : vector<4xf32>
    %65 = vector.multi_reduction <maximumf>, %64, %cst_24 [1] : vector<4x8xf32> to vector<4xf32>
    %66 = vector.shape_cast %65 : vector<4xf32> to vector<4x1xf32>
    %67 = vector.broadcast %66 : vector<4x1xf32> to vector<4x8xf32>
    %68 = arith.subf %64, %67 : vector<4x8xf32>
    %69 = math.exp %68 : vector<4x8xf32>
    %cst_25 = arith.constant dense<0.000000e+00> : vector<4xf32>
    %70 = vector.multi_reduction <add>, %69, %cst_25 [1] : vector<4x8xf32> to vector<4xf32>
    %71 = vector.shape_cast %70 : vector<4xf32> to vector<4x1xf32>
    %72 = tpu.reciprocal %71 {approx = true} : vector<4x1xf32> -> vector<4x1xf32>
    %73 = vector.broadcast %72 : vector<4x1xf32> to vector<4x8xf32>
    %74 = arith.mulf %69, %73 : vector<4x8xf32>
    %75 = arith.truncf %74 : vector<4x8xf32> to vector<4x8xbf16>
    %76 = tpu.concatenate %30, %45, %60, %75 in 1 : vector<4x8xbf16>, vector<4x8xbf16>, vector<4x8xbf16>, vector<4x8xbf16> -> vector<4x32xbf16>
    %c0_26 = arith.constant 0 : index
    %c0_27 = arith.constant 0 : index
    %c0_28 = arith.constant 0 : index
    %77 = vector.load %arg3[%c0_26, %c0_27, %c0_28] : memref<1x32x32xbf16, #tpu.memory_space<vmem>>, vector<1x32x32xbf16>
    %78 = vector.shape_cast %77 : vector<1x32x32xbf16> to vector<32x32xbf16>
    %cst_29 = arith.constant dense<0.000000e+00> : vector<4x32xf32>
    %79 = tpu.matmul %76, %78, %cst_29 {dimension_numbers = #tpu.dot_dimension_numbers<[1], [0], [0], [1], [0, 0, 1, 1], [], []>} : vector<4x32xbf16>, vector<32x32xbf16>, vector<4x32xf32> -> vector<4x32xf32>
    %c0_30 = arith.constant 0 : index
    %c0_31 = arith.constant 0 : index
    %c0_32 = arith.constant 0 : index
    %80 = vector.load %arg7[%c0_30, %c0_31, %c0_32] : memref<1x4x32xf32, #tpu.memory_space<vmem>>, vector<1x4x32xf32>
    %81 = vector.shape_cast %80 : vector<1x4x32xf32> to vector<4x32xf32>
    %82 = vector.shape_cast %79 : vector<4x32xf32> to vector<1x4x32xf32>
    tpu.vector_store %arg7[%c0_30, %c0_31, %c0_32], %82 {strides = array<i32>} : memref<1x4x32xf32, #tpu.memory_space<vmem>>, vector<1x4x32xf32>,
    return
  }
  func.func @transform_0(%arg0: i32) -> (i32, i32, i32) {
    %c0_i32 = arith.constant 0 : i32
    %c0_i32_0 = arith.constant 0 : i32
    %c0_i32_1 = arith.constant 0 : i32
    return %arg0, %c0_i32, %c0_i32_0 : i32, i32, i32
  }
  func.func @transform_1(%arg0: i32) -> (i32, i32, i32) {
    %c0_i32 = arith.constant 0 : i32
    %c0_i32_0 = arith.constant 0 : i32
    %c0_i32_1 = arith.constant 0 : i32
    return %arg0, %c0_i32, %c0_i32_0 : i32, i32, i32
  }
  func.func @transform_2(%arg0: i32) -> (i32, i32, i32) {
    %c0_i32 = arith.constant 0 : i32
    %c0_i32_0 = arith.constant 0 : i32
    %c0_i32_1 = arith.constant 0 : i32
    return %arg0, %c0_i32, %c0_i32_0 : i32, i32, i32
  }
  func.func @transform_3(%arg0: i32) -> (i32, i32, i32) {
    %c0_i32 = arith.constant 0 : i32
    %c0_i32_0 = arith.constant 0 : i32
    %c0_i32_1 = arith.constant 0 : i32
    return %arg0, %c0_i32, %c0_i32_0 : i32, i32, i32
  }
  func.func @transform_4(%arg0: i32) -> (i32, i32) {
    %c0_i32 = arith.constant 0 : i32
    %c0_i32_0 = arith.constant 0 : i32
    %c0_i32_1 = arith.constant 0 : i32
    return %c0_i32, %c0_i32_0 : i32, i32
  }
  func.func @transform_5(%arg0: i32) -> (i32, i32) {
    %c0_i32 = arith.constant 0 : i32
    %c0_i32_0 = arith.constant 0 : i32
    %c0_i32_1 = arith.constant 0 : i32
    return %c0_i32, %c0_i32_0 : i32, i32
  }
  func.func @transform_6(%arg0: i32) -> (i32, i32, i32) {
    %c0_i32 = arith.constant 0 : i32
    %c0_i32_0 = arith.constant 0 : i32
    %c0_i32_1 = arith.constant 0 : i32
    return %arg0, %c0_i32, %c0_i32_0 : i32, i32, i32
  }
}

</mosaic_0001>

<llo_original>
// kernel: tpu_custom_call.1
$region0: #{tpu_custom_call.1}
  #allocation0 [shape = 'u32[]', space=smem, size = 0x4, offset = 0x4, fixed_abs, tag = 'smem constant byte address 0x4 - core index']
  #allocation1 [shape = 'u32[72,128]{1,0:T(1,128)}', space=vmem, size = 0x9000, scoped, tag = 'internal scratch']
  %s0 = inlined_call_operand.hbm [shape: bf16[2,4,16], index: 0, kind: input, shape index: {}]
  %s1 = inlined_call_operand.hbm [shape: bf16[2,8,32], index: 1, kind: input, shape index: {}]
  %s2 = inlined_call_operand.hbm [shape: bf16[2,32,32], index: 2, kind: input, shape index: {}]
  %s3 = inlined_call_operand.vmem [shape: f32[2,1,8], index: 3, kind: input, shape index: {}]
  %s4 = inlined_call_operand.hbm [shape: bf16[16,32], index: 4, kind: input, shape index: {}]
  %s5 = inlined_call_operand.hbm [shape: bf16[32,32], index: 5, kind: input, shape index: {}]
  %s6 = inlined_call_operand.hbm [shape: f32[2,4,32], index: 6, kind: output, shape index: {}]
  %s7 = sld [smem:[#allocation0]]
  $region77: #{tpu_custom_call.1} parent=0
    _
  %s9 = ssub.s32 1, %s7
  %s10 = scalar_select 0, %s9, %s7
  $region1: #{tpu_custom_call.1} parent=0
    #allocation2 [shape = 'u8[2048]{0}', space=vmem, size = 0x800, scoped, tag = 'input window, operand 0']
    #allocation3 [shape = 's32[2]{0}', space=sflag, size = 0x8, scoped, tag = 'scoped memory for tpu_custom_call.1']
    #allocation4 [shape = 's32[2]{0}', space=sflag, size = 0x8, scoped, tag = 'scoped memory for tpu_custom_call.1']
    #allocation5 [shape = 'u8[4096]{0}', space=vmem, size = 0x1000, scoped, tag = 'input window, operand 1']
    #allocation6 [shape = 's32[2]{0}', space=sflag, size = 0x8, scoped, tag = 'scoped memory for tpu_custom_call.1']
    #allocation7 [shape = 'u8[16384]{0}', space=vmem, size = 0x4000, scoped, tag = 'input window, operand 2']
    #allocation8 [shape = 'u8[4096]{0}', space=vmem, size = 0x1000, scoped, tag = 'input window, operand 4, single buffered']
    #allocation9 [shape = 's32[1]{0}', space=sflag, size = 0x4, scoped, tag = 'scoped memory for tpu_custom_call.1']
    #allocation10 [shape = 'u8[8192]{0}', space=vmem, size = 0x2000, scoped, tag = 'input window, operand 5, single buffered']
    #allocation11 [shape = 'u8[4096]{0}', space=vmem, size = 0x1000, scoped, tag = 'output window, operand 0']
    %11 = vsyncpa [#allocation3], 0
    %s12 = scalar_lea.sflag [#allocation3], 1
    %13 = vsyncpa %s12, 0
    %14 = vsyncpa [#allocation6], 0
    %s15 = scalar_lea.sflag [#allocation6], 1
    %16 = vsyncpa %s15, 0
    %17 = vsyncpa [#allocation9], 0
    %18 = vsyncpa [#allocation4], 0
    %s19 = scalar_lea.sflag [#allocation4], 1
    %20 = vsyncpa %s19, 0
    loop: start=0, step=1, limit=4
    $region2: #{tpu_custom_call.1} parent=1 // loop_pre_header
      _
    $region3: #{tpu_custom_call.1} parent=1 // loop_header
      %s22 = sphi 0, %s26
      %p23 = scmp.ge.s32.totalorder %s22, 4
      %s32 = sphi 0, %s34
      %s35 = sphi 0, %s32
      %s36 = sphi 0, %s35
      %s52 = sphi 0, %s36
      %s58 = sphi 0, %s60
      %s61 = sphi 0, %s58
      %s62 = sphi 0, %s61
      %s78 = sphi 0, %s62
      %s84 = sphi 0, %s86
      %s87 = sphi 0, %s84
      %s88 = sphi 0, %s87
      %s104 = sphi 0, %s88
      %s110 = sphi 0, %s112
      %s113 = sphi 0, %s110
      %s114 = sphi 0, %s113
      %s130 = sphi 0, %s114
      %s134 = sphi 0, %s134
      %s136 = sphi 0, %s134
      %s137 = sphi 0, %s136
      %s151 = sphi 0, %s137
      %s155 = sphi 0, %s155
      %s157 = sphi 0, %s155
      %s158 = sphi 0, %s157
      %s172 = sphi 0, %s158
      %s178 = sphi 0, %s180
      %s181 = sphi 0, %s178
      %s182 = sphi 0, %s181
      %s198 = sphi 0, %s182
    $region4: #{tpu_custom_call.1} parent=1 // loop_header_branch
      %25 = sbr.rel (%p23) target = $region8
    $region5: #{tpu_custom_call.1} parent=1 // loop_body
      %s27 = ssub.s32 %s22, 1
      %s28 = ssub.s32 %s22, 2
      %s29 = sadd.s32 %s22, 1
      %s30 = ssub.s32 %s22, %s29
      %p31 = scmp.eq.s32.totalorder %s30, 0
      %s33 = sadd.s32 %s32, 1
      %s34 = scalar_select %p31, %s32, %s33
      %p37 = pneg %p31
      %p38 = scmp.eq.s32.totalorder %s22, 1
      %p39 = por %p37, %p38
      %p40 = scmp.ne.s32.totalorder %s32, %s35
      %p41 = scmp.eq.s32.totalorder %s22, 0
      %p42 = por %p40, %p41
      %p43 = scmp.ne.s32.totalorder %s32, %s35
      %p44 = scmp.eq.s32.totalorder %s27, 1
      %p45 = por %p43, %p44
      %p46 = scmp.ne.s32.totalorder %s35, %s36
      %p47 = scmp.eq.s32.totalorder %s27, 0
      %p48 = por %p46, %p47
      %p49 = scmp.ne.s32.totalorder %s35, %s36
      %p50 = scmp.eq.s32.totalorder %s28, 1
      %p51 = por %p49, %p50
      %p53 = scmp.ne.s32.totalorder %s36, %s52
      %p54 = scmp.eq.s32.totalorder %s28, 0
      %p55 = por %p53, %p54
      %s56 = ssub.s32 %s22, %s29
      %p57 = scmp.eq.s32.totalorder %s56, 0
      %s59 = sadd.s32 %s58, 1
      %s60 = scalar_select %p57, %s58, %s59
      %p63 = pneg %p57
      %p64 = scmp.eq.s32.totalorder %s22, 1
      %p65 = por %p63, %p64
      %p66 = scmp.ne.s32.totalorder %s58, %s61
      %p67 = scmp.eq.s32.totalorder %s22, 0
      %p68 = por %p66, %p67
      %p69 = scmp.ne.s32.totalorder %s58, %s61
      %p70 = scmp.eq.s32.totalorder %s27, 1
      %p71 = por %p69, %p70
      %p72 = scmp.ne.s32.totalorder %s61, %s62
      %p73 = scmp.eq.s32.totalorder %s27, 0
      %p74 = por %p72, %p73
      %p75 = scmp.ne.s32.totalorder %s61, %s62
      %p76 = scmp.eq.s32.totalorder %s28, 1
      %p77 = por %p75, %p76
      %p79 = scmp.ne.s32.totalorder %s62, %s78
      %p80 = scmp.eq.s32.totalorder %s28, 0
      %p81 = por %p79, %p80
      %s82 = ssub.s32 %s22, %s29
      %p83 = scmp.eq.s32.totalorder %s82, 0
      %s85 = sadd.s32 %s84, 1
      %s86 = scalar_select %p83, %s84, %s85
      %p89 = pneg %p83
      %p90 = scmp.eq.s32.totalorder %s22, 1
      %p91 = por %p89, %p90
      %p92 = scmp.ne.s32.totalorder %s84, %s87
      %p93 = scmp.eq.s32.totalorder %s22, 0
      %p94 = por %p92, %p93
      %p95 = scmp.ne.s32.totalorder %s84, %s87
      %p96 = scmp.eq.s32.totalorder %s27, 1
      %p97 = por %p95, %p96
      %p98 = scmp.ne.s32.totalorder %s87, %s88
      %p99 = scmp.eq.s32.totalorder %s27, 0
      %p100 = por %p98, %p99
      %p101 = scmp.ne.s32.totalorder %s87, %s88
      %p102 = scmp.eq.s32.totalorder %s28, 1
      %p103 = por %p101, %p102
      %p105 = scmp.ne.s32.totalorder %s88, %s104
      %p106 = scmp.eq.s32.totalorder %s28, 0
      %p107 = por %p105, %p106
      %s108 = ssub.s32 %s22, %s29
      %p109 = scmp.eq.s32.totalorder %s108, 0
      %s111 = sadd.s32 %s110, 1
      %s112 = scalar_select %p109, %s110, %s111
      %p115 = pneg %p109
      %p116 = scmp.eq.s32.totalorder %s22, 1
      %p117 = por %p115, %p116
      %p118 = scmp.ne.s32.totalorder %s110, %s113
      %p119 = scmp.eq.s32.totalorder %s22, 0
      %p120 = por %p118, %p119
      %p121 = scmp.ne.s32.totalorder %s110, %s113
      %p122 = scmp.eq.s32.totalorder %s27, 1
      %p123 = por %p121, %p122
      %p124 = scmp.ne.s32.totalorder %s113, %s114
      %p125 = scmp.eq.s32.totalorder %s27, 0
      %p126 = por %p124, %p125
      %p127 = scmp.ne.s32.totalorder %s113, %s114
      %p128 = scmp.eq.s32.totalorder %s28, 1
      %p129 = por %p127, %p128
      %p131 = scmp.ne.s32.totalorder %s114, %s130
      %p132 = scmp.eq.s32.totalorder %s28, 0
      %p133 = por %p131, %p132
      %s135 = sadd.s32 %s134, 1
      %p138 = scmp.eq.s32.totalorder %s22, 1
      %p139 = scmp.ne.s32.totalorder %s134, %s136
      %p140 = scmp.eq.s32.totalorder %s22, 0
      %p141 = por %p139, %p140
      %p142 = scmp.ne.s32.totalorder %s134, %s136
      %p143 = scmp.eq.s32.totalorder %s27, 1
      %p144 = por %p142, %p143
      %p145 = scmp.ne.s32.totalorder %s136, %s137
      %p146 = scmp.eq.s32.totalorder %s27, 0
      %p147 = por %p145, %p146
      %p148 = scmp.ne.s32.totalorder %s136, %s137
      %p149 = scmp.eq.s32.totalorder %s28, 1
      %p150 = por %p148, %p149
      %p152 = scmp.ne.s32.totalorder %s137, %s151
      %p153 = scmp.eq.s32.totalorder %s28, 0
      %p154 = por %p152, %p153
      %s156 = sadd.s32 %s155, 1
      %p159 = scmp.eq.s32.totalorder %s22, 1
      %p160 = scmp.ne.s32.totalorder %s155, %s157
      %p161 = scmp.eq.s32.totalorder %s22, 0
      %p162 = por %p160, %p161
      %p163 = scmp.ne.s32.totalorder %s155, %s157
      %p164 = scmp.eq.s32.totalorder %s27, 1
      %p165 = por %p163, %p164
      %p166 = scmp.ne.s32.totalorder %s157, %s158
      %p167 = scmp.eq.s32.totalorder %s27, 0
      %p168 = por %p166, %p167
      %p169 = scmp.ne.s32.totalorder %s157, %s158
      %p170 = scmp.eq.s32.totalorder %s28, 1
      %p171 = por %p169, %p170
      %p173 = scmp.ne.s32.totalorder %s158, %s172
      %p174 = scmp.eq.s32.totalorder %s28, 0
      %p175 = por %p173, %p174
      %s176 = ssub.s32 %s22, %s29
      %p177 = scmp.eq.s32.totalorder %s176, 0
      %s179 = sadd.s32 %s178, 1
      %s180 = scalar_select %p177, %s178, %s179
      %p183 = pneg %p177
      %p184 = scmp.eq.s32.totalorder %s22, 1
      %p185 = por %p183, %p184
      %p186 = scmp.ne.s32.totalorder %s178, %s181
      %p187 = scmp.eq.s32.totalorder %s22, 0
      %p188 = por %p186, %p187
      %p189 = scmp.ne.s32.totalorder %s178, %s181
      %p190 = scmp.eq.s32.totalorder %s27, 1
      %p191 = por %p189, %p190
      %p192 = scmp.ne.s32.totalorder %s181, %s182
      %p193 = scmp.eq.s32.totalorder %s27, 0
      %p194 = por %p192, %p193
      %p195 = scmp.ne.s32.totalorder %s181, %s182
      %p196 = scmp.eq.s32.totalorder %s28, 1
      %p197 = por %p195, %p196
      %p199 = scmp.ne.s32.totalorder %s182, %s198
      %p200 = scmp.eq.s32.totalorder %s28, 0
      %p201 = por %p199, %p200
      %p202 = scmp.le.s32.totalorder 1, %s22
      %p203 = scmp.lt.s32.totalorder %s22, 3
      %p204 = pnand %p202, %p203
      %p205 = pneg %p204
      // Predicated region
      $region9: #{tpu_custom_call.1} parent=5 // pred_check
        _
      $region10: #{tpu_custom_call.1} parent=5 // pred_check_branch
        %207 = sbr.rel (%p204) target = $region12
      $region11: #{tpu_custom_call.1} parent=5 // pred_region
        %s208 = ssub.s32 %s22, 1
        // Predicated region
        $region13: #{tpu_custom_call.1} parent=11 // pred_check
          %p209 = pneg %p147
        $region14: #{tpu_custom_call.1} parent=11 // pred_check_branch
          %211 = sbr.rel (%p209) target = $region16
        $region15: #{tpu_custom_call.1} parent=11 // pred_region
          %213 = vsyncadd [#allocation9], 0
          %s214 = sshll.u32 %s4, 4
          %s215 = int_to_ptr.hbm [resolvable:$true] %s214
          %s216 = sshll.u32 [#allocation8], 4
          %s217 = int_to_ptr.vmem [resolvable:$true] %s216
          %222 = dma.hbm_to_vmem [thread:$0]  %s215, 128, %s217, [#allocation9], 64, 64, 4
        $region16: #{tpu_custom_call.1} parent=11 // pred_fallthru
          _
        // Predicated region
        $region17: #{tpu_custom_call.1} parent=11 // pred_check
          %p223 = pneg %p168
        $region18: #{tpu_custom_call.1} parent=11 // pred_check_branch
          %225 = sbr.rel (%p223) target = $region20
        $region19: #{tpu_custom_call.1} parent=11 // pred_region
          %227 = vsyncadd [#allocation9], 0
          %s228 = sshll.u32 %s5, 4
          %s229 = int_to_ptr.hbm [resolvable:$true] %s228
          %s230 = sshll.u32 [#allocation10], 4
          %s231 = int_to_ptr.vmem [resolvable:$true] %s230
          %236 = dma.hbm_to_vmem [thread:$0]  %s229, 256, %s231, [#allocation9], 64, 64, 4
        $region20: #{tpu_custom_call.1} parent=11 // pred_fallthru
          _
      $region12: #{tpu_custom_call.1} parent=5 // pred_fallthru
        _
      %p237 = scmp.lt.s32.totalorder %s22, 2
      // Predicated region
      $region21: #{tpu_custom_call.1} parent=5 // pred_check
        %p238 = pneg %p237
      $region22: #{tpu_custom_call.1} parent=5 // pred_check_branch
        %240 = sbr.rel (%p238) target = $region24
      $region23: #{tpu_custom_call.1} parent=5 // pred_region
        // Predicated region
        $region25: #{tpu_custom_call.1} parent=23 // pred_check
          %p241 = pneg %p42
        $region26: #{tpu_custom_call.1} parent=23 // pred_check_branch
          %243 = sbr.rel (%p241) target = $region28
        $region27: #{tpu_custom_call.1} parent=23 // pred_region
          %s244 = sand.u32 %s32, 1
          %s245 = scalar_lea.sflag [#allocation3], %s244
          %s246 = sand.u32 %s32, 1
          %s247 = smul.addr %s246, 2
          %s248 = scalar_lea.vmem [#allocation2], %s247
          %250 = vsyncadd %s245, 0
          %s251 = smul.addr %s22, 2
          %s252 = scalar_lea.hbm %s0, %s251
          %s254 = sshll.u32 %s252, 4
          %s255 = int_to_ptr.hbm [resolvable:$true] %s254
          %s256 = sshll.u32 %s248, 4
          %s257 = int_to_ptr.vmem [resolvable:$true] %s256
          %259 = dma.hbm_to_vmem [thread:$0]  %s255, 32, %s257, %s245
        $region28: #{tpu_custom_call.1} parent=23 // pred_fallthru
          _
        // Predicated region
        $region29: #{tpu_custom_call.1} parent=23 // pred_check
          %p260 = pneg %p68
        $region30: #{tpu_custom_call.1} parent=23 // pred_check_branch
          %262 = sbr.rel (%p260) target = $region32
        $region31: #{tpu_custom_call.1} parent=23 // pred_region
          %s263 = sand.u32 %s22, 1
          %s264 = scalar_lea.sflag [#allocation6], %s263
          %s265 = sand.u32 %s58, 1
          %s266 = smul.addr %s265, 4
          %s267 = scalar_lea.vmem [#allocation5], %s266
          %269 = vsyncadd %s264, 0
          %s270 = smul.addr %s22, 4
          %s271 = scalar_lea.hbm %s1, %s270
          %s273 = sshll.u32 %s271, 4
          %s274 = int_to_ptr.hbm [resolvable:$true] %s273
          %s275 = sshll.u32 %s267, 4
          %s276 = int_to_ptr.vmem [resolvable:$true] %s275
          %278 = dma.hbm_to_vmem [thread:$0]  %s274, 64, %s276, %s264
        $region32: #{tpu_custom_call.1} parent=23 // pred_fallthru
          _
        // Predicated region
        $region33: #{tpu_custom_call.1} parent=23 // pred_check
          %p279 = pneg %p94
        $region34: #{tpu_custom_call.1} parent=23 // pred_check_branch
          %281 = sbr.rel (%p279) target = $region36
        $region35: #{tpu_custom_call.1} parent=23 // pred_region
          %s282 = sand.u32 %s22, 1
          %s283 = scalar_lea.sflag [#allocation6], %s282
          %s284 = sand.u32 %s84, 1
          %s285 = smul.addr %s284, 16
          %s286 = scalar_lea.vmem [#allocation7], %s285
          %288 = vsyncadd %s283, 0
          %s289 = smul.addr %s22, 4
          %s290 = smul.addr %s289, 4
          %s291 = scalar_lea.hbm %s2, %s290
          %s292 = sshll.u32 %s291, 4
          %s293 = int_to_ptr.hbm [resolvable:$true] %s292
          %s294 = sshll.u32 %s286, 4
          %s295 = int_to_ptr.vmem [resolvable:$true] %s294
          %300 = dma.hbm_to_vmem [thread:$0]  %s293, 256, %s295, %s283, 64, 64, 4
        $region36: #{tpu_custom_call.1} parent=23 // pred_fallthru
          _
        // Predicated region
        $region37: #{tpu_custom_call.1} parent=23 // pred_check
          %p301 = pneg %p120
        $region38: #{tpu_custom_call.1} parent=23 // pred_check_branch
          %303 = sbr.rel (%p301) target = $region40
        $region39: #{tpu_custom_call.1} parent=23 // pred_region
          %p304 = scmp.lt.s32.totalorder %s22, 1
          %s305 = scalar_select %p304, %s22, 1
          %s306 = scalar_lea.vmem %s3, %s305
        $region40: #{tpu_custom_call.1} parent=23 // pred_fallthru
          _
      $region24: #{tpu_custom_call.1} parent=5 // pred_fallthru
        _
      %p307 = scmp.le.s32.totalorder 1, %s22
      %p308 = scmp.lt.s32.totalorder %s22, 3
      %p309 = pnand %p307, %p308
      %p310 = pneg %p309
      // Predicated region
      $region41: #{tpu_custom_call.1} parent=5 // pred_check
        _
      $region42: #{tpu_custom_call.1} parent=5 // pred_check_branch
        %312 = sbr.rel (%p309) target = $region44
      $region43: #{tpu_custom_call.1} parent=5 // pred_region
        %s313 = ssub.s32 %s22, 1
        %s314 = sand.u32 %s35, 1
        %s315 = scalar_lea.sflag [#allocation3], %s314
        %s316 = sand.u32 %s35, 1
        %s317 = smul.addr %s316, 2
        %s318 = scalar_lea.vmem [#allocation2], %s317
        // Predicated region
        $region45: #{tpu_custom_call.1} parent=43 // pred_check
          %p319 = pneg %p48
        $region46: #{tpu_custom_call.1} parent=43 // pred_check_branch
          %321 = sbr.rel (%p319) target = $region48
        $region47: #{tpu_custom_call.1} parent=43 // pred_region
          %323 = dma.done %s315, 32
        $region48: #{tpu_custom_call.1} parent=43 // pred_fallthru
          _
        %s324 = sand.u32 %s27, 1
        %s325 = scalar_lea.sflag [#allocation6], %s324
        %s326 = sand.u32 %s61, 1
        %s327 = smul.addr %s326, 4
        %s328 = scalar_lea.vmem [#allocation5], %s327
        // Predicated region
        $region49: #{tpu_custom_call.1} parent=43 // pred_check
          %p329 = pneg %p74
        $region50: #{tpu_custom_call.1} parent=43 // pred_check_branch
          %331 = sbr.rel (%p329) target = $region52
        $region51: #{tpu_custom_call.1} parent=43 // pred_region
          %333 = dma.done %s325, 64
        $region52: #{tpu_custom_call.1} parent=43 // pred_fallthru
          _
        %s334 = sand.u32 %s27, 1
        %s335 = scalar_lea.sflag [#allocation6], %s334
        %s336 = sand.u32 %s87, 1
        %s337 = smul.addr %s336, 16
        %s338 = scalar_lea.vmem [#allocation7], %s337
        // Predicated region
        $region53: #{tpu_custom_call.1} parent=43 // pred_check
          %p339 = pneg %p100
        $region54: #{tpu_custom_call.1} parent=43 // pred_check_branch
          %341 = sbr.rel (%p339) target = $region56
        $region55: #{tpu_custom_call.1} parent=43 // pred_region
          %343 = dma.done %s335, 256
        $region56: #{tpu_custom_call.1} parent=43 // pred_fallthru
          _
        // Predicated region
        $region57: #{tpu_custom_call.1} parent=43 // pred_check
          %p344 = pneg %p147
        $region58: #{tpu_custom_call.1} parent=43 // pred_check_branch
          %346 = sbr.rel (%p344) target = $region60
        $region59: #{tpu_custom_call.1} parent=43 // pred_region
          %348 = dma.done [#allocation9], 128
        $region60: #{tpu_custom_call.1} parent=43 // pred_fallthru
          _
        // Predicated region
        $region61: #{tpu_custom_call.1} parent=43 // pred_check
          %p349 = pneg %p168
        $region62: #{tpu_custom_call.1} parent=43 // pred_check_branch
          %351 = sbr.rel (%p349) target = $region64
        $region63: #{tpu_custom_call.1} parent=43 // pred_region
          %353 = dma.done [#allocation9], 256
        $region64: #{tpu_custom_call.1} parent=43 // pred_fallthru
          _
        %s354 = sand.u32 %s35, 1
        %s355 = scalar_lea.sflag [#allocation3], %s354
        %s356 = sand.u32 %s35, 1
        %s357 = smul.addr %s356, 2
        %s358 = scalar_lea.vmem [#allocation2], %s357
        %p359 = pneg %p48
        %p360 = pneg %p45
        %s361 = sand.u32 %s27, 1
        %s362 = scalar_lea.sflag [#allocation6], %s361
        %s363 = sand.u32 %s61, 1
        %s364 = smul.addr %s363, 4
        %s365 = scalar_lea.vmem [#allocation5], %s364
        %p366 = pneg %p74
        %p367 = pneg %p71
        %s368 = sand.u32 %s27, 1
        %s369 = scalar_lea.sflag [#allocation6], %s368
        %s370 = sand.u32 %s87, 1
        %s371 = smul.addr %s370, 16
        %s372 = scalar_lea.vmem [#allocation7], %s371
        %p373 = pneg %p100
        %p374 = pneg %p97
        %p375 = scmp.lt.s32.totalorder %s27, 1
        %s376 = scalar_select %p375, %s27, 1
        %s377 = scalar_lea.vmem %s3, %s376
        %p378 = pneg %p126
        %p379 = pneg %p123
        %p380 = pneg %p147
        %p381 = pneg %p144
        %p382 = pneg %p168
        %p383 = pneg %p165
        %p384 = pneg %p194
        %p385 = pneg %p191
        %s386 = sand.u32 %s181, 1
        %s387 = scalar_lea.sflag [#allocation4], %s386
        %s388 = sand.u32 %s181, 1
        %s389 = smul.addr %s388, 4
        %s390 = scalar_lea.vmem [#allocation11], %s389
        %p391 = scmp.lt.s32.totalorder %s27, 1
        %s392 = scalar_select %p391, %s27, 1
        %s393 = scalar_lea.vmem %s3, %s392
        %v395 = vld [vmem:[%s318] sm:$0x3]
        %v396 = vld [vmem:[%s328] sm:$0xf]
        %v397 = vld [vmem:[#allocation8] sm:$0xf]
        %v398 = vld [vmem:[#allocation8 + $0x4] sm:$0xf]
        %v401 = vunpack.c.l.b16 %v397
        %v402 = vunpack.c.l.b16 %v398
        %v403 = vpack.c.b16 %v402, %v401
        %vm405 = vcmask 130048
        %v407 = vsel %vm405, %v395, 0
        %409 = vmatpush.bf16.msra.mxu0 0
        %410 = vmatpush.bf16.msra.mxu0 0
        %411 = vmatpush.bf16.msra.mxu0 0
        %412 = vmatpush.bf16.msra.mxu0 0
        %413 = vmatpush.bf16.msra.mxu0 0
        %414 = vmatpush.bf16.msra.mxu0 0
        %415 = vmatpush.bf16.msra.mxu0 0
        %416 = vmatpush.bf16.msra.mxu0 %v403
        %417 = vmatmul.bf16.gmra.mxu0 %v407
        %v418 = vpop.f32.mrf.mxu0
        %v419 = vadd.f32 0.0, %v418
        %v420 = vpop.f32.mrf.mxu0
        %421 = vdwg.mxu0
        %v422 = vmul.f32 %v419, 0.35355338
        %v423 = vpack.c.bf16 %v422, %v422
        %v424 = vld [vmem:[#allocation10] sm:$0xf]
        %v425 = vld [vmem:[#allocation10 + $0x4] sm:$0xf]
        %v426 = vld [vmem:[#allocation10 + $0x8] sm:$0xf]
        %v427 = vld [vmem:[#allocation10 + $0xc] sm:$0xf]
        %v432 = vunpack.c.l.b16 %v424
        %v433 = vunpack.c.l.b16 %v425
        %v434 = vunpack.c.l.b16 %v426
        %v435 = vunpack.c.l.b16 %v427
        %v436 = vpack.c.b16 %v433, %v432
        %v437 = vpack.c.b16 %v435, %v434
        %vm440 = vcmask 261120
        %v442 = vsel %vm440, %v396, 0
        %444 = vmatpush.bf16.msra.mxu0 0
        %445 = vmatpush.bf16.msra.mxu0 0
        %446 = vmatpush.bf16.msra.mxu0 0
        %447 = vmatpush.bf16.msra.mxu0 0
        %448 = vmatpush.bf16.msra.mxu0 0
        %449 = vmatpush.bf16.msra.mxu0 0
        %450 = vmatpush.bf16.msra.mxu0 %v437
        %451 = vmatpush.bf16.msra.mxu0 %v436
        %452 = vmatmul.bf16.gmra.mxu0 %v442
        %v453 = vpop.f32.mrf.mxu0
        %v454 = vadd.f32 0.0, %v453
        %v455 = vpop.f32.mrf.mxu0
        %456 = vdwg.mxu0
        %v457 = vpack.c.bf16 %v454, %v454
        %v458 = vld [vmem:[%s393] sm:$0x1]
        %v460 = vperm.slane %v458, 0
        %vm462 = vcmask 64512
        %v464 = vsel %vm462, %v423, 0
        %v467 = vsel %vm462, %v457, 0
        %469 = vmatpush.bf16.xpose.msra.mxu0 0
        %470 = vmatpush.bf16.xpose.msra.mxu0 0
        %471 = vmatpush.bf16.xpose.msra.mxu0 0
        %472 = vmatpush.bf16.xpose.msra.mxu0 0
        %473 = vmatpush.bf16.xpose.msra.mxu0 0
        %474 = vmatpush.bf16.xpose.msra.mxu0 0
        %475 = vmatpush.bf16.xpose.msra.mxu0 0
        %476 = vmatpush.bf16.xpose.msra.mxu0 %v467
        %477 = vmatmul.bf16.gmra.mxu0 %v464
        %v478 = vpop.f32.mrf.mxu0
        %v479 = vadd.f32 %v460, %v478
        %v480 = vpop.f32.mrf.mxu0
        %481 = vdwg.mxu0
        %vm482 = vcmask 60416
        %v483 = vsel %vm482, %v479, -inf
        %484 = vmax.xlane.f32.xlu0 %v483
        %v485 = vpop.xlane.xlu0 %484
        %v486 = vsub.f32 %v479, %v485
        %v487 = vmul.f32 %v486, 1.442695
        %v488 = vpow.pop %v487
        %v489 = vsel %vm482, %v488, 0.0
        %490 = vadd.xlane.f32.xlu0 %v489
        %v491 = vpop.xlane.xlu0 %490
        %v492 = vrcp.pop %v491
        %v493 = vmul.f32 %v488, %v492
        %v494 = vpack.c.bf16 %v493, %v493
        %v496 = vunpack.c.l.b16 %v423
        %v497 = vpack.c.b16 %v496, %v496
        %498 = vrot.lane.b32.xlu0 %v497, 120
        %v499 = vpop.permute.xlu0 %498
        %v501 = vunpack.c.l.b16 %v457
        %v502 = vpack.c.b16 %v501, %v501
        %503 = vrot.lane.b32.xlu0 %v502, 120
        %v504 = vpop.permute.xlu0 %503
        %v506 = vsel %vm462, %v499, 0
        %v509 = vsel %vm462, %v504, 0
        %511 = vmatpush.bf16.xpose.msra.mxu0 0
        %512 = vmatpush.bf16.xpose.msra.mxu0 0
        %513 = vmatpush.bf16.xpose.msra.mxu0 0
        %514 = vmatpush.bf16.xpose.msra.mxu0 0
        %515 = vmatpush.bf16.xpose.msra.mxu0 0
        %516 = vmatpush.bf16.xpose.msra.mxu0 0
        %517 = vmatpush.bf16.xpose.msra.mxu0 0
        %518 = vmatpush.bf16.xpose.msra.mxu0 %v509
        %519 = vmatmul.bf16.gmra.mxu0 %v506
        %v520 = vpop.f32.mrf.mxu0
        %v521 = vadd.f32 %v460, %v520
        %v522 = vpop.f32.mrf.mxu0
        %523 = vdwg.mxu0
        %v524 = vsel %vm482, %v521, -inf
        %525 = vmax.xlane.f32.xlu0 %v524
        %v526 = vpop.xlane.xlu0 %525
        %v527 = vsub.f32 %v521, %v526
        %v528 = vmul.f32 %v527, 1.442695
        %v529 = vpow.pop %v528
        %v530 = vsel %vm482, %v529, 0.0
        %531 = vadd.xlane.f32.xlu0 %v530
        %v532 = vpop.xlane.xlu0 %531
        %v533 = vrcp.pop %v532
        %v534 = vmul.f32 %v529, %v533
        %v535 = vpack.c.bf16 %v534, %v534
        %536 = vrot.lane.b32.xlu0 %v497, 112
        %v537 = vpop.permute.xlu0 %536
        %538 = vrot.lane.b32.xlu0 %v502, 112
        %v539 = vpop.permute.xlu0 %538
        %v541 = vsel %vm462, %v537, 0
        %v544 = vsel %vm462, %v539, 0
        %546 = vmatpush.bf16.xpose.msra.mxu0 0
        %547 = vmatpush.bf16.xpose.msra.mxu0 0
        %548 = vmatpush.bf16.xpose.msra.mxu0 0
        %549 = vmatpush.bf16.xpose.msra.mxu0 0
        %550 = vmatpush.bf16.xpose.msra.mxu0 0
        %551 = vmatpush.bf16.xpose.msra.mxu0 0
        %552 = vmatpush.bf16.xpose.msra.mxu0 0
        %553 = vmatpush.bf16.xpose.msra.mxu0 %v544
        %554 = vmatmul.bf16.gmra.mxu0 %v541
        %v555 = vpop.f32.mrf.mxu0
        %v556 = vadd.f32 %v460, %v555
        %v557 = vpop.f32.mrf.mxu0
        %558 = vdwg.mxu0
        %v559 = vsel %vm482, %v556, -inf
        %560 = vmax.xlane.f32.xlu0 %v559
        %v561 = vpop.xlane.xlu0 %560
        %v562 = vsub.f32 %v556, %v561
        %v563 = vmul.f32 %v562, 1.442695
        %v564 = vpow.pop %v563
        %v565 = vsel %vm482, %v564, 0.0
        %566 = vadd.xlane.f32.xlu0 %v565
        %v567 = vpop.xlane.xlu0 %566
        %v568 = vrcp.pop %v567
        %v569 = vmul.f32 %v564, %v568
        %v570 = vpack.c.bf16 %v569, %v569
        %571 = vrot.lane.b32.xlu0 %v497, 104
        %v572 = vpop.permute.xlu0 %571
        %573 = vrot.lane.b32.xlu0 %v502, 104
        %v574 = vpop.permute.xlu0 %573
        %v576 = vsel %vm462, %v572, 0
        %v579 = vsel %vm462, %v574, 0
        %581 = vmatpush.bf16.xpose.msra.mxu0 0
        %582 = vmatpush.bf16.xpose.msra.mxu0 0
        %583 = vmatpush.bf16.xpose.msra.mxu0 0
        %584 = vmatpush.bf16.xpose.msra.mxu0 0
        %585 = vmatpush.bf16.xpose.msra.mxu0 0
        %586 = vmatpush.bf16.xpose.msra.mxu0 0
        %587 = vmatpush.bf16.xpose.msra.mxu0 0
        %588 = vmatpush.bf16.xpose.msra.mxu0 %v579
        %589 = vmatmul.bf16.gmra.mxu0 %v576
        %v590 = vpop.f32.mrf.mxu0
        %v591 = vadd.f32 %v460, %v590
        %v592 = vpop.f32.mrf.mxu0
        %593 = vdwg.mxu0
        %v594 = vsel %vm482, %v591, -inf
        %595 = vmax.xlane.f32.xlu0 %v594
        %v596 = vpop.xlane.xlu0 %595
        %v597 = vsub.f32 %v591, %v596
        %v598 = vmul.f32 %v597, 1.442695
        %v599 = vpow.pop %v598
        %v600 = vsel %vm482, %v599, 0.0
        %601 = vadd.xlane.f32.xlu0 %v600
        %v602 = vpop.xlane.xlu0 %601
        %v603 = vrcp.pop %v602
        %v604 = vmul.f32 %v599, %v603
        %v605 = vpack.c.bf16 %v604, %v604
        %v607 = vunpack.c.l.b16 %v535
        %v608 = vpack.c.b16 %v607, %v607
        %609 = vrot.lane.b32.xlu0 %v608, 8
        %v610 = vpop.permute.xlu0 %609
        %v612 = vunpack.c.l.b16 %v570
        %v613 = vpack.c.b16 %v612, %v612
        %614 = vrot.lane.b32.xlu0 %v613, 16
        %v615 = vpop.permute.xlu0 %614
        %v617 = vunpack.c.l.b16 %v605
        %v618 = vpack.c.b16 %v617, %v617
        %619 = vrot.lane.b32.xlu0 %v618, 24
        %v620 = vpop.permute.xlu0 %619
        %v623 = vsel %vm462, %v494, %v610
        %v625 = vsel %vm405, %v623, %v615
        %vm626 = vcmask 195584
        %v628 = vsel %vm626, %v625, %v620
        %v629 = vld [vmem:[%s338] sm:$0xf]
        %v630 = vld [vmem:[%s338 + $0x4] sm:$0xf]
        %v631 = vld [vmem:[%s338 + $0x8] sm:$0xf]
        %v632 = vld [vmem:[%s338 + $0xc] sm:$0xf]
        %v637 = vunpack.c.l.b16 %v629
        %v638 = vunpack.c.l.b16 %v630
        %v639 = vunpack.c.l.b16 %v631
        %v640 = vunpack.c.l.b16 %v632
        %v641 = vpack.c.b16 %v638, %v637
        %v642 = vpack.c.b16 %v640, %v639
        %v645 = vsel %vm440, %v628, 0
        %647 = vmatpush.bf16.msra.mxu0 0
        %648 = vmatpush.bf16.msra.mxu0 0
        %649 = vmatpush.bf16.msra.mxu0 0
        %650 = vmatpush.bf16.msra.mxu0 0
        %651 = vmatpush.bf16.msra.mxu0 0
        %652 = vmatpush.bf16.msra.mxu0 0
        %653 = vmatpush.bf16.msra.mxu0 %v642
        %654 = vmatpush.bf16.msra.mxu0 %v641
        %655 = vmatmul.bf16.gmra.mxu0 %v645
        %v656 = vpop.f32.mrf.mxu0
        %v657 = vadd.f32 0.0, %v656
        %v658 = vpop.f32.mrf.mxu0
        %659 = vdwg.mxu0
        %vm660 = vcmask 257024
        %661 = vst.msk [vmem:[%s390] sm:$0xf] %vm660, %v657
        %s662 = sand.u32 %s181, 1
        %s663 = scalar_lea.sflag [#allocation4], %s662
        %s664 = sand.u32 %s181, 1
        %s665 = smul.addr %s664, 4
        %s666 = scalar_lea.vmem [#allocation11], %s665
        // Predicated region
        $region65: #{tpu_custom_call.1} parent=43 // pred_check
          %p667 = pneg %p191
        $region66: #{tpu_custom_call.1} parent=43 // pred_check_branch
          %669 = sbr.rel (%p667) target = $region68
        $region67: #{tpu_custom_call.1} parent=43 // pred_region
          %671 = vsyncadd %s663, 0
          %s672 = smul.addr %s27, 4
          %s673 = scalar_lea.hbm %s6, %s672
          %s675 = sshll.u32 %s666, 4
          %s676 = int_to_ptr.vmem [resolvable:$true] %s675
          %s677 = sshll.u32 %s673, 4
          %s678 = int_to_ptr.hbm [resolvable:$true] %s677
          %680 = dma.vmem_to_hbm [thread:$0]  %s676, 64, %s678, %s663
        $region68: #{tpu_custom_call.1} parent=43 // pred_fallthru
          _
      $region44: #{tpu_custom_call.1} parent=5 // pred_fallthru
        _
      %p681 = scmp.le.s32.totalorder 2, %s22
      // Predicated region
      $region69: #{tpu_custom_call.1} parent=5 // pred_check
        %p682 = pneg %p681
      $region70: #{tpu_custom_call.1} parent=5 // pred_check_branch
        %684 = sbr.rel (%p682) target = $region72
      $region71: #{tpu_custom_call.1} parent=5 // pred_region
        %s685 = ssub.s32 %s22, 2
        // Predicated region
        $region73: #{tpu_custom_call.1} parent=71 // pred_check
          %p686 = pneg %p197
        $region74: #{tpu_custom_call.1} parent=71 // pred_check_branch
          %688 = sbr.rel (%p686) target = $region76
        $region75: #{tpu_custom_call.1} parent=71 // pred_region
          %s689 = sand.u32 %s182, 1
          %s690 = scalar_lea.sflag [#allocation4], %s689
          %s691 = sand.u32 %s182, 1
          %s692 = smul.addr %s691, 4
          %s693 = scalar_lea.vmem [#allocation11], %s692
          %695 = dma.done %s690, 64
        $region76: #{tpu_custom_call.1} parent=71 // pred_fallthru
          _
      $region72: #{tpu_custom_call.1} parent=5 // pred_fallthru
        _
    $region6: #{tpu_custom_call.1} parent=1 // loop_footer
      %s26 = sadd.s32 1, %s22
    $region7: #{tpu_custom_call.1} parent=1 // loop_footer_branch
      %21 = sbr.rel target = $region3
    $region8: #{tpu_custom_call.1} parent=1 // loop_exit
      _
    %696 = vsyncpa [#allocation3], 1
    %s697 = scalar_lea.sflag [#allocation3], 1
    %698 = vsyncpa %s697, 1
    %699 = vsyncpa [#allocation6], 1
    %s700 = scalar_lea.sflag [#allocation6], 1
    %701 = vsyncpa %s700, 1
    %702 = vsyncpa [#allocation9], 1
    %703 = vsyncpa [#allocation4], 1
    %s704 = scalar_lea.sflag [#allocation4], 1
    %705 = vsyncpa %s704, 1

</llo_original>
